<compile_context>
chip_gen: v5e
topology: v5e:2x2
jax: 0.10.0
libtpu: 0.0.40
codegen_flags: <defaults>
</compile_context>

<pallas_src>
import jax
import jax.numpy as jnp
from jax import lax
from jax.experimental import pallas as pl
from jax.experimental.pallas import tpu as pltpu


def clip_adapter_kernel(x_ref, w_ref, text_t_ref, out_ref, acc_ref):
    """Fused: project -> L2-normalize(dim=-1) -> 100 * img_n @ text.T

    Grid: (batch tiles [parallel], F tiles [arbitrary / reduction]).

    x_ref:      [tB, tF]     flattened image tile, bf16
    w_ref:      [tF, D]      stand-in visual projection tile, bf16
    text_t_ref: [D, C_pad]   pre-transposed normalized text features, bf16
    out_ref:    [tB, C_pad]  similarity logits, f32 (lane-dense)
    acc_ref:    [tB, D]      f32 accumulator scratch (persists across k)
    """
    k = pl.program_id(1)

    @pl.when(k == 0)
    def _():
        acc_ref[...] = jnp.zeros_like(acc_ref)

    # "visual encoder" projection: bf16 x bf16 -> f32 accumulate on the MXU.
    acc_ref[...] += jnp.dot(x_ref[...], w_ref[...],
                            preferred_element_type=jnp.float32)

    @pl.when(k == pl.num_programs(1) - 1)
    def _():
        feats = acc_ref[...]                                       # [tB, D] f32
        # L2 normalization in f32 (VPU/EUP); temperature folded into scale.
        sq_norm = jnp.sum(feats * feats, axis=-1, keepdims=True)   # [tB, 1]
        scale = 100.0 * lax.rsqrt(jnp.maximum(sq_norm, 1e-12))     # [tB, 1]
        feats_n = feats * scale                                    # stay f32
        # get_sim_logits: (100 * img_n) @ text.T (text pre-transposed).
        out_ref[...] = jnp.dot(feats_n, text_t_ref[...].astype(jnp.float32),
                               preferred_element_type=jnp.float32)


def _pick_tile(total, candidates):
    for c in candidates:
        if total % c == 0:
            return c
    return total


def prepare_clip_adapter_params(w_proj, text_features, lane=128):
    """One-time preparation (hoisted out of the per-call path).

    w_proj:        [F, D] stand-in visual projection (f32)
    text_features: [C_txt, D] L2-normalized text embeddings (f32)
    Returns (w_bf16 [F, D], text_t bf16 [D, C_pad]).
    """
    C_txt, D = text_features.shape
    C_pad = max(lane, -(-C_txt // lane) * lane)                    # lane-dense
    w_bf16 = w_proj.astype(jnp.bfloat16)
    text_t = jnp.zeros((D, C_pad), jnp.bfloat16).at[:, :C_txt].set(
        text_features.astype(jnp.bfloat16).T)                      # [D, C_pad]
    return w_bf16, text_t


def clip_adapter_forward(image_nchw, w_bf16, text_t, n_classes):
    """image_nchw: [B, C, H, W]; w_bf16: [F, D]; text_t: [D, C_pad]."""
    B = image_nchw.shape[0]
    x_bf16 = image_nchw.reshape(B, -1).astype(jnp.bfloat16)        # [B, F]
    F_, D = w_bf16.shape
    C_pad = text_t.shape[1]

    # Tile sizes: batch full-extent when small (exempt from (8,128) rule),
    # otherwise a multiple of 16 (bf16 sublane tiling); F tiles lane-aligned.
    tB = B if B <= 16 else _pick_tile(B, (256, 128, 64, 32, 16))
    tF = _pick_tile(F_, (512, 256, 128))
    grid = (B // tB, F_ // tF)

    # VMEM budget: double-buffered inputs/output + f32 accumulator, with
    # headroom; explicit so v7x's 64 MiB physical VMEM is never exceeded.
    block_bytes = (2 * (tB * tF * 2) + 2 * (tF * D * 2)
                   + 2 * (D * C_pad * 2) + 2 * (tB * C_pad * 4)
                   + tB * D * 4)
    vmem_limit = int(min(max(4 * block_bytes, 8 << 20), 100 << 20))

    cost = pl.CostEstimate(
        flops=2 * B * F_ * D + 2 * B * D * C_pad,
        transcendentals=B,
        bytes_accessed=B * F_ * 2 + F_ * D * 2 + D * C_pad * 2 + B * C_pad * 4,
    )

    out_pad = pl.pallas_call(
        clip_adapter_kernel,
        out_shape=jax.ShapeDtypeStruct((B, C_pad), jnp.float32),
        grid_spec=pltpu.PrefetchScalarGridSpec(
            num_scalar_prefetch=0,
            grid=grid,
            in_specs=[
                pl.BlockSpec((tB, tF), lambda b, k: (b, k)),
                pl.BlockSpec((tF, D), lambda b, k: (k, 0)),
                pl.BlockSpec((D, C_pad), lambda b, k: (0, 0)),
            ],
            out_specs=pl.BlockSpec((tB, C_pad), lambda b, k: (b, 0)),
            scratch_shapes=[pltpu.VMEM((tB, D), jnp.float32)],
        ),
        compiler_params=pltpu.CompilerParams(
            dimension_semantics=("parallel", "arbitrary"),
            vmem_limit_bytes=vmem_limit),
        cost_estimate=cost,
    )(x_bf16, w_bf16, text_t)

    return out_pad[:, :n_classes]


def reference_forward_f32(image_nchw, w_proj, text_features):
    """Pure-f32 semantics of the PyTorch module (projection stand-in)."""
    B = image_nchw.shape[0]
    x = image_nchw.reshape(B, -1).astype(jnp.float32)
    feats = x @ w_proj.astype(jnp.float32)
    feats = feats / jnp.linalg.norm(feats, axis=-1, keepdims=True)
    return 100.0 * feats @ text_features.astype(jnp.float32).T


def reference_forward_bf16(image_nchw, w_proj, text_features):
    """Emulates the kernel's bf16 MXU operands (f32 accumulate, f32 second dot)."""
    B = image_nchw.shape[0]
    x = image_nchw.reshape(B, -1).astype(jnp.bfloat16).astype(jnp.float32)
    w = w_proj.astype(jnp.bfloat16).astype(jnp.float32)
    t = text_features.astype(jnp.bfloat16).astype(jnp.float32)
    feats = x @ w
    scale = 100.0 * lax.rsqrt(
        jnp.maximum(jnp.sum(feats * feats, axis=-1, keepdims=True), 1e-12))
    feats_n = feats * scale
    return feats_n @ t.T


if __name__ == "__main__":
    key = jax.random.PRNGKey(0)
    k_img, k_proj, k_txt = jax.random.split(key, 3)

    B, C, H, W = 2, 3, 16, 16          # small image batch (NCHW)
    D = 128                            # embedding dim (CLIP-like, lane-aligned)
    N_CLASSES = 8                      # number of text prompts / classes
    F_ = C * H * W                     # flattened feature length = 768

    image = jax.random.normal(k_img, (B, C, H, W), dtype=jnp.float32)
    w_proj = jax.random.normal(k_proj, (F_, D), dtype=jnp.float32) * 0.02

    # Synthesized, pre-normalized text features (prompt-template output).
    text_raw = jax.random.normal(k_txt, (N_CLASSES, D), dtype=jnp.float32)
    text_features = text_raw / jnp.linalg.norm(text_raw, axis=-1, keepdims=True)

    # One-time param prep (hoisted out of the per-call path).
    w_bf16, text_t = prepare_clip_adapter_params(w_proj, text_features)

    logits = clip_adapter_forward(image, w_bf16, text_t, N_CLASSES)
    jax.block_until_ready(logits)
    assert logits.shape == (B, N_CLASSES)
    assert bool(jnp.all(jnp.isfinite(logits)))

    # Tight check vs a reference that emulates the kernel's bf16 MXU operands.
    ref_bf16 = reference_forward_bf16(image, w_proj, text_features)
    assert jnp.allclose(logits, ref_bf16, atol=1e-1, rtol=1e-2), \
        "mismatch vs bf16-emulated reference"

    # Loose check vs the exact f32 module semantics (bf16 quantization error).
    ref_f32 = reference_forward_f32(image, w_proj, text_features)
    assert jnp.allclose(logits, ref_f32, atol=2.0, rtol=5e-2), \
        "mismatch vs f32 reference"

    print("KERNEL_OK")
</pallas_src>

<mosaic_0001>
module attributes {stable_mosaic.version = 11 : i64} {
  func.func @clip_adapter_kernel(%arg0: i32, %arg1: i32, %arg2: memref<2x256xbf16, #tpu.memory_space<vmem>>, %arg3: memref<256x128xbf16, #tpu.memory_space<vmem>>, %arg4: memref<128x128xbf16, #tpu.memory_space<vmem>>, %arg5: memref<2x128xf32, #tpu.memory_space<vmem>>, %arg6: memref<2x128xf32, #tpu.memory_space<vmem>>) attributes {dimension_semantics = [#tpu.dimension_semantics<parallel>, #tpu.dimension_semantics<arbitrary>], iteration_bounds = array<i64: 1, 3>, scalar_prefetch = 0 : i64, scratch_operands = 1 : i64, tpu.core_type = #tpu.core_type<tc>, window_params = [{transform_indices = @transform_0, window_bounds = array<i64: 2, 256>}, {transform_indices = @transform_1, window_bounds = array<i64: 256, 128>}, {pipeline_mode = #tpu.pipeline_mode<synchronous>, transform_indices = @transform_2, window_bounds = array<i64: 128, 128>}, {transform_indices = @transform_3, window_bounds = array<i64: 2, 128>}]} {
    %c0_i32 = arith.constant 0 : i32
    %0 = arith.cmpi eq, %arg1, %c0_i32 : i32
    %1 = arith.extui %0 : i1 to i32
    %c0_i32_0 = arith.constant 0 : i32
    %2 = arith.cmpi ne, %1, %c0_i32_0 : i32
    scf.if %2 {
      %cst_9 = arith.constant 0.000000e+00 : f32
      %12 = vector.broadcast %cst_9 : f32 to vector<2x128xf32>
      %c0_10 = arith.constant 0 : index
      %c0_11 = arith.constant 0 : index
      %13 = vector.load %arg6[%c0_10, %c0_11] : memref<2x128xf32, #tpu.memory_space<vmem>>, vector<2x128xf32>
      tpu.vector_store %arg6[%c0_10, %c0_11], %12 {strides = array<i32>} : memref<2x128xf32, #tpu.memory_space<vmem>>, vector<2x128xf32>,
    } else {
    }
    %c0 = arith.constant 0 : index
    %c0_1 = arith.constant 0 : index
    %3 = vector.load %arg6[%c0, %c0_1] : memref<2x128xf32, #tpu.memory_space<vmem>>, vector<2x128xf32>
    %c0_2 = arith.constant 0 : index
    %c0_3 = arith.constant 0 : index
    %4 = vector.load %arg2[%c0_2, %c0_3] : memref<2x256xbf16, #tpu.memory_space<vmem>>, vector<2x256xbf16>
    %c0_4 = arith.constant 0 : index
    %c0_5 = arith.constant 0 : index
    %5 = vector.load %arg3[%c0_4, %c0_5] : memref<256x128xbf16, #tpu.memory_space<vmem>>, vector<256x128xbf16>
    %cst = arith.constant dense<0.000000e+00> : vector<2x128xf32>
    %6 = tpu.matmul %4, %5, %cst {dimension_numbers = #tpu.dot_dimension_numbers<[1], [0], [0], [1], [0, 0, 1, 1], [], []>} : vector<2x256xbf16>, vector<256x128xbf16>, vector<2x128xf32> -> vector<2x128xf32>
    %7 = arith.addf %3, %6 : vector<2x128xf32>
    %c0_6 = arith.constant 0 : index
    %c0_7 = arith.constant 0 : index
    %8 = vector.load %arg6[%c0_6, %c0_7] : memref<2x128xf32, #tpu.memory_space<vmem>>, vector<2x128xf32>
    tpu.vector_store %arg6[%c0_6, %c0_7], %7 {strides = array<i32>} : memref<2x128xf32, #tpu.memory_space<vmem>>, vector<2x128xf32>,
    %c2_i32 = arith.constant 2 : i32
    %9 = arith.cmpi eq, %arg1, %c2_i32 : i32
    %10 = arith.extui %9 : i1 to i32
    %c0_i32_8 = arith.constant 0 : i32
    %11 = arith.cmpi ne, %10, %c0_i32_8 : i32
    scf.if %11 {
      %c0_9 = arith.constant 0 : index
      %c0_10 = arith.constant 0 : index
      %12 = vector.load %arg6[%c0_9, %c0_10] : memref<2x128xf32, #tpu.memory_space<vmem>>, vector<2x128xf32>
      %13 = arith.mulf %12, %12 : vector<2x128xf32>
      %cst_11 = arith.constant dense<0.000000e+00> : vector<2xf32>
      %14 = vector.multi_reduction <add>, %13, %cst_11 [1] : vector<2x128xf32> to vector<2xf32>
      %15 = vector.shape_cast %14 : vector<2xf32> to vector<2x1xf32>
      %cst_12 = arith.constant 9.99999996E-13 : f32
      %16 = vector.broadcast %cst_12 : f32 to vector<2x1xf32>
      %17 = arith.maximumf %15, %16 : vector<2x1xf32>
      %18 = math.rsqrt %17 : vector<2x1xf32>
      %cst_13 = arith.constant 1.000000e+02 : f32
      %19 = vector.broadcast %cst_13 : f32 to vector<2x1xf32>
      %20 = arith.mulf %19, %18 : vector<2x1xf32>
      %21 = vector.broadcast %20 : vector<2x1xf32> to vector<2x128xf32>
      %22 = arith.mulf %12, %21 : vector<2x128xf32>
      %c0_14 = arith.constant 0 : index
      %c0_15 = arith.constant 0 : index
      %23 = vector.load %arg4[%c0_14, %c0_15] : memref<128x128xbf16, #tpu.memory_space<vmem>>, vector<128x128xbf16>
      %24 = arith.extf %23 : vector<128x128xbf16> to vector<128x128xf32>
      %cst_16 = arith.constant dense<0.000000e+00> : vector<2x128xf32>
      %25 = tpu.matmul %22, %24, %cst_16 {dimension_numbers = #tpu.dot_dimension_numbers<[1], [0], [0], [1], [0, 0, 1, 1], [], []>} : vector<2x128xf32>, vector<128x128xf32>, vector<2x128xf32> -> vector<2x128xf32>
      %c0_17 = arith.constant 0 : index
      %c0_18 = arith.constant 0 : index
      %26 = vector.load %arg5[%c0_17, %c0_18] : memref<2x128xf32, #tpu.memory_space<vmem>>, vector<2x128xf32>
      tpu.vector_store %arg5[%c0_17, %c0_18], %25 {strides = array<i32>} : memref<2x128xf32, #tpu.memory_space<vmem>>, vector<2x128xf32>,
    } else {
    }
    return
  }
  func.func @transform_0(%arg0: i32, %arg1: i32) -> (i32, i32) {
    %c0_i32 = arith.constant 0 : i32
    return %arg0, %arg1 : i32, i32
  }
  func.func @transform_1(%arg0: i32, %arg1: i32) -> (i32, i32) {
    %c0_i32 = arith.constant 0 : i32
    %c0_i32_0 = arith.constant 0 : i32
    return %arg1, %c0_i32 : i32, i32
  }
  func.func @transform_2(%arg0: i32, %arg1: i32) -> (i32, i32) {
    %c0_i32 = arith.constant 0 : i32
    %c0_i32_0 = arith.constant 0 : i32
    %c0_i32_1 = arith.constant 0 : i32
    return %c0_i32, %c0_i32_0 : i32, i32
  }
  func.func @transform_3(%arg0: i32, %arg1: i32) -> (i32, i32) {
    %c0_i32 = arith.constant 0 : i32
    %c0_i32_0 = arith.constant 0 : i32
    return %arg0, %c0_i32 : i32, i32
  }
}

</mosaic_0001>

<llo_original>
// kernel: tpu_custom_call.1
$region0: #{tpu_custom_call.1}
  #allocation0 [shape = 'u32[]', space=smem, size = 0x4, offset = 0x4, fixed_abs, tag = 'smem constant byte address 0x4 - core index']
  #allocation1 [shape = 'u32[72,128]{1,0:T(1,128)}', space=vmem, size = 0x9000, scoped, tag = 'internal scratch']
  #allocation2 [shape = 'f32[2,128]{1,0:T(2,128)}', space=vmem, size = 0x400, scoped, tag = 'scratch operand']
  %s0 = inlined_call_operand.hbm [shape: bf16[2,768], index: 0, kind: input, shape index: {}]
  %s1 = inlined_call_operand.hbm [shape: bf16[768,128], index: 1, kind: input, shape index: {}]
  %s2 = inlined_call_operand.hbm [shape: bf16[128,128], index: 2, kind: input, shape index: {}]
  %s3 = inlined_call_operand.hbm [shape: f32[2,128], index: 3, kind: output, shape index: {}]
  %s4 = sld [smem:[#allocation0]]
  $region65: #{tpu_custom_call.1} parent=0
    _
  %s6 = ssub.s32 1, %s4
  %s7 = scalar_select 0, %s6, %s4
  $region1: #{tpu_custom_call.1} parent=0
    #allocation3 [shape = 'u8[2048]{0}', space=vmem, size = 0x800, scoped, tag = 'input window, operand 0']
    #allocation4 [shape = 's32[2]{0}', space=sflag, size = 0x8, scoped, tag = 'scoped memory for tpu_custom_call.1']
    #allocation5 [shape = 's32[2]{0}', space=sflag, size = 0x8, scoped, tag = 'scoped memory for tpu_custom_call.1']
    #allocation6 [shape = 'u8[131072]{0}', space=vmem, size = 0x20000, scoped, tag = 'input window, operand 1']
    #allocation7 [shape = 's32[2]{0}', space=sflag, size = 0x8, scoped, tag = 'scoped memory for tpu_custom_call.1']
    #allocation8 [shape = 'u8[32768]{0}', space=vmem, size = 0x8000, scoped, tag = 'input window, operand 2, single buffered']
    #allocation9 [shape = 'u8[1024]{0}', space=vmem, size = 0x400, scoped, tag = 'output window, operand 0, single buffered']
    %8 = vsyncpa [#allocation4], 0
    %s9 = scalar_lea.sflag [#allocation4], 1
    %10 = vsyncpa %s9, 0
    %11 = vsyncpa [#allocation7], 0
    %s12 = scalar_lea.sflag [#allocation7], 1
    %13 = vsyncpa %s12, 0
    %14 = vsyncpa [#allocation5], 0
    loop: start=0, step=1, limit=5
    $region2: #{tpu_custom_call.1} parent=1 // loop_pre_header
      _
    $region3: #{tpu_custom_call.1} parent=1 // loop_header
      %s16 = sphi 0, %s20
      %p17 = scmp.ge.s32.totalorder %s16, 5
      %s23 = sphi 0, %s35
      %s24 = sphi 0, %s31
      %s25 = sphi 0, %s23
      %s26 = sphi 0, %s24
      %s27 = sphi 0, %s25
      %s28 = sphi 0, %s26
      %s40 = sphi 0, %s42
      %s43 = sphi 0, %s40
      %s44 = sphi 0, %s43
      %s60 = sphi 0, %s44
      %s66 = sphi 0, %s68
      %s69 = sphi 0, %s66
      %s70 = sphi 0, %s69
      %s86 = sphi 0, %s70
      %s90 = sphi 0, %s90
      %s92 = sphi 0, %s90
      %s93 = sphi 0, %s92
      %s107 = sphi 0, %s93
      %s113 = sphi 0, %s115
      %s116 = sphi 0, %s113
      %s117 = sphi 0, %s116
      %s133 = sphi 0, %s117
    $region4: #{tpu_custom_call.1} parent=1 // loop_header_branch
      %19 = sbr.rel (%p17) target = $region8
    $region5: #{tpu_custom_call.1} parent=1 // loop_body
      %s21 = ssub.s32 %s16, 1
      %s22 = ssub.s32 %s16, 2
      %s29 = sadd.s32 1, %s24
      %p30 = scmp.ge.s32.totalorder %s29, 3
      %s31 = scalar_select %p30, 0, %s29
      %s32 = sadd.s32 1, %s23
      %s33 = scalar_select %p30, %s32, %s23
      %p34 = scmp.ge.s32.totalorder %s33, 1
      %s35 = scalar_select %p34, 0, %s33
      %s36 = ssub.s32 %s23, %s35
      %s37 = ssub.s32 %s24, %s31
      %s38 = sor.u32 %s36, %s37
      %p39 = scmp.eq.s32.totalorder %s38, 0
      %s41 = sadd.s32 %s40, 1
      %s42 = scalar_select %p39, %s40, %s41
      %p45 = pneg %p39
      %p46 = scmp.eq.s32.totalorder %s16, 2
      %p47 = por %p45, %p46
      %p48 = scmp.ne.s32.totalorder %s40, %s43
      %p49 = scmp.eq.s32.totalorder %s16, 0
      %p50 = por %p48, %p49
      %p51 = scmp.ne.s32.totalorder %s40, %s43
      %p52 = scmp.eq.s32.totalorder %s21, 2
      %p53 = por %p51, %p52
      %p54 = scmp.ne.s32.totalorder %s43, %s44
      %p55 = scmp.eq.s32.totalorder %s21, 0
      %p56 = por %p54, %p55
      %p57 = scmp.ne.s32.totalorder %s43, %s44
      %p58 = scmp.eq.s32.totalorder %s22, 2
      %p59 = por %p57, %p58
      %p61 = scmp.ne.s32.totalorder %s44, %s60
      %p62 = scmp.eq.s32.totalorder %s22, 0
      %p63 = por %p61, %p62
      %s64 = ssub.s32 %s24, %s31
      %p65 = scmp.eq.s32.totalorder %s64, 0
      %s67 = sadd.s32 %s66, 1
      %s68 = scalar_select %p65, %s66, %s67
      %p71 = pneg %p65
      %p72 = scmp.eq.s32.totalorder %s16, 2
      %p73 = por %p71, %p72
      %p74 = scmp.ne.s32.totalorder %s66, %s69
      %p75 = scmp.eq.s32.totalorder %s16, 0
      %p76 = por %p74, %p75
      %p77 = scmp.ne.s32.totalorder %s66, %s69
      %p78 = scmp.eq.s32.totalorder %s21, 2
      %p79 = por %p77, %p78
      %p80 = scmp.ne.s32.totalorder %s69, %s70
      %p81 = scmp.eq.s32.totalorder %s21, 0
      %p82 = por %p80, %p81
      %p83 = scmp.ne.s32.totalorder %s69, %s70
      %p84 = scmp.eq.s32.totalorder %s22, 2
      %p85 = por %p83, %p84
      %p87 = scmp.ne.s32.totalorder %s70, %s86
      %p88 = scmp.eq.s32.totalorder %s22, 0
      %p89 = por %p87, %p88
      %s91 = sadd.s32 %s90, 1
      %p94 = scmp.eq.s32.totalorder %s16, 2
      %p95 = scmp.ne.s32.totalorder %s90, %s92
      %p96 = scmp.eq.s32.totalorder %s16, 0
      %p97 = por %p95, %p96
      %p98 = scmp.ne.s32.totalorder %s90, %s92
      %p99 = scmp.eq.s32.totalorder %s21, 2
      %p100 = por %p98, %p99
      %p101 = scmp.ne.s32.totalorder %s92, %s93
      %p102 = scmp.eq.s32.totalorder %s21, 0
      %p103 = por %p101, %p102
      %p104 = scmp.ne.s32.totalorder %s92, %s93
      %p105 = scmp.eq.s32.totalorder %s22, 2
      %p106 = por %p104, %p105
      %p108 = scmp.ne.s32.totalorder %s93, %s107
      %p109 = scmp.eq.s32.totalorder %s22, 0
      %p110 = por %p108, %p109
      %s111 = ssub.s32 %s23, %s35
      %p112 = scmp.eq.s32.totalorder %s111, 0
      %s114 = sadd.s32 %s113, 1
      %s115 = scalar_select %p112, %s113, %s114
      %p118 = pneg %p112
      %p119 = scmp.eq.s32.totalorder %s16, 2
      %p120 = por %p118, %p119
      %p121 = scmp.ne.s32.totalorder %s113, %s116
      %p122 = scmp.eq.s32.totalorder %s16, 0
      %p123 = por %p121, %p122
      %p124 = scmp.ne.s32.totalorder %s113, %s116
      %p125 = scmp.eq.s32.totalorder %s21, 2
      %p126 = por %p124, %p125
      %p127 = scmp.ne.s32.totalorder %s116, %s117
      %p128 = scmp.eq.s32.totalorder %s21, 0
      %p129 = por %p127, %p128
      %p130 = scmp.ne.s32.totalorder %s116, %s117
      %p131 = scmp.eq.s32.totalorder %s22, 2
      %p132 = por %p130, %p131
      %p134 = scmp.ne.s32.totalorder %s117, %s133
      %p135 = scmp.eq.s32.totalorder %s22, 0
      %p136 = por %p134, %p135
      %p137 = scmp.le.s32.totalorder 1, %s16
      %p138 = scmp.lt.s32.totalorder %s16, 4
      %p139 = pnand %p137, %p138
      %p140 = pneg %p139
      // Predicated region
      $region9: #{tpu_custom_call.1} parent=5 // pred_check
        _
      $region10: #{tpu_custom_call.1} parent=5 // pred_check_branch
        %142 = sbr.rel (%p139) target = $region12
      $region11: #{tpu_custom_call.1} parent=5 // pred_region
        %s143 = ssub.s32 %s16, 1
        // Predicated region
        $region13: #{tpu_custom_call.1} parent=11 // pred_check
          %p144 = pneg %p103
        $region14: #{tpu_custom_call.1} parent=11 // pred_check_branch
          %146 = sbr.rel (%p144) target = $region16
        $region15: #{tpu_custom_call.1} parent=11 // pred_region
          %148 = vsyncadd [#allocation7], 0
          %s149 = sshll.u32 %s2, 4
          %s150 = int_to_ptr.hbm [resolvable:$true] %s149
          %s151 = sshll.u32 [#allocation8], 4
          %s152 = int_to_ptr.vmem [resolvable:$true] %s151
          %157 = dma.hbm_to_vmem [thread:$0]  %s150, 1024, %s152, [#allocation7], 64, 64, 4
        $region16: #{tpu_custom_call.1} parent=11 // pred_fallthru
          _
      $region12: #{tpu_custom_call.1} parent=5 // pred_fallthru
        _
      %p158 = scmp.lt.s32.totalorder %s16, 3
      // Predicated region
      $region17: #{tpu_custom_call.1} parent=5 // pred_check
        %p159 = pneg %p158
      $region18: #{tpu_custom_call.1} parent=5 // pred_check_branch
        %161 = sbr.rel (%p159) target = $region20
      $region19: #{tpu_custom_call.1} parent=5 // pred_region
        // Predicated region
        $region21: #{tpu_custom_call.1} parent=19 // pred_check
          %p162 = pneg %p50
        $region22: #{tpu_custom_call.1} parent=19 // pred_check_branch
          %164 = sbr.rel (%p162) target = $region24
        $region23: #{tpu_custom_call.1} parent=19 // pred_region
          %s165 = sand.u32 %s40, 1
          %s166 = scalar_lea.sflag [#allocation4], %s165
          %s167 = sand.u32 %s40, 1
          %s168 = smul.addr %s167, 2
          %s169 = scalar_lea.vmem [#allocation3], %s168
          %s170 = smul.u32 2, %s24
          %172 = vsyncadd %s166, 0
          %s173 = smul.addr %s23, 6
          %s174 = sadd.s32 %s170, %s173
          %s175 = scalar_lea.hbm %s0, %s174
          %s177 = sshll.u32 %s175, 4
          %s178 = int_to_ptr.hbm [resolvable:$true] %s177
          %s179 = sshll.u32 %s169, 4
          %s180 = int_to_ptr.vmem [resolvable:$true] %s179
          %182 = dma.hbm_to_vmem [thread:$0]  %s178, 32, %s180, %s166
        $region24: #{tpu_custom_call.1} parent=19 // pred_fallthru
          _
        // Predicated region
        $region25: #{tpu_custom_call.1} parent=19 // pred_check
          %p183 = pneg %p76
        $region26: #{tpu_custom_call.1} parent=19 // pred_check_branch
          %185 = sbr.rel (%p183) target = $region28
        $region27: #{tpu_custom_call.1} parent=19 // pred_region
          %s186 = sand.u32 %s16, 1
          %s187 = scalar_lea.sflag [#allocation7], %s186
          %s188 = sand.u32 %s66, 1
          %s189 = smul.addr %s188, 128
          %s190 = scalar_lea.vmem [#allocation6], %s189
          %s191 = smul.u32 32, %s24
          %193 = vsyncadd %s187, 0
          %s194 = smul.addr %s191, 4
          %s195 = scalar_lea.hbm %s1, %s194
          %s196 = sshll.u32 %s195, 4
          %s197 = int_to_ptr.hbm [resolvable:$true] %s196
          %s198 = sshll.u32 %s190, 4
          %s199 = int_to_ptr.vmem [resolvable:$true] %s198
          %204 = dma.hbm_to_vmem [thread:$0]  %s197, 2048, %s199, %s187, 64, 64, 4
        $region28: #{tpu_custom_call.1} parent=19 // pred_fallthru
          _
      $region20: #{tpu_custom_call.1} parent=5 // pred_fallthru
        _
      %p205 = scmp.le.s32.totalorder 1, %s16
      %p206 = scmp.lt.s32.totalorder %s16, 4
      %p207 = pnand %p205, %p206
      %p208 = pneg %p207
      // Predicated region
      $region29: #{tpu_custom_call.1} parent=5 // pred_check
        _
      $region30: #{tpu_custom_call.1} parent=5 // pred_check_branch
        %210 = sbr.rel (%p207) target = $region32
      $region31: #{tpu_custom_call.1} parent=5 // pred_region
        %s211 = ssub.s32 %s16, 1
        %s212 = sand.u32 %s43, 1
        %s213 = scalar_lea.sflag [#allocation4], %s212
        %s214 = sand.u32 %s43, 1
        %s215 = smul.addr %s214, 2
        %s216 = scalar_lea.vmem [#allocation3], %s215
        // Predicated region
        $region33: #{tpu_custom_call.1} parent=31 // pred_check
          %p217 = pneg %p56
        $region34: #{tpu_custom_call.1} parent=31 // pred_check_branch
          %219 = sbr.rel (%p217) target = $region36
        $region35: #{tpu_custom_call.1} parent=31 // pred_region
          %221 = dma.done %s213, 32
        $region36: #{tpu_custom_call.1} parent=31 // pred_fallthru
          _
        %s222 = sand.u32 %s21, 1
        %s223 = scalar_lea.sflag [#allocation7], %s222
        %s224 = sand.u32 %s69, 1
        %s225 = smul.addr %s224, 128
        %s226 = scalar_lea.vmem [#allocation6], %s225
        // Predicated region
        $region37: #{tpu_custom_call.1} parent=31 // pred_check
          %p227 = pneg %p82
        $region38: #{tpu_custom_call.1} parent=31 // pred_check_branch
          %229 = sbr.rel (%p227) target = $region40
        $region39: #{tpu_custom_call.1} parent=31 // pred_region
          %231 = dma.done %s223, 2048
        $region40: #{tpu_custom_call.1} parent=31 // pred_fallthru
          _
        // Predicated region
        $region41: #{tpu_custom_call.1} parent=31 // pred_check
          %p232 = pneg %p103
        $region42: #{tpu_custom_call.1} parent=31 // pred_check_branch
          %234 = sbr.rel (%p232) target = $region44
        $region43: #{tpu_custom_call.1} parent=31 // pred_region
          %236 = dma.done [#allocation7], 1024
        $region44: #{tpu_custom_call.1} parent=31 // pred_fallthru
          _
        %s237 = sand.u32 %s43, 1
        %s238 = scalar_lea.sflag [#allocation4], %s237
        %s239 = sand.u32 %s43, 1
        %s240 = smul.addr %s239, 2
        %s241 = scalar_lea.vmem [#allocation3], %s240
        %p242 = pneg %p56
        %p243 = pneg %p53
        %s244 = sand.u32 %s21, 1
        %s245 = scalar_lea.sflag [#allocation7], %s244
        %s246 = sand.u32 %s69, 1
        %s247 = smul.addr %s246, 128
        %s248 = scalar_lea.vmem [#allocation6], %s247
        %p249 = pneg %p82
        %p250 = pneg %p79
        %p251 = pneg %p103
        %p252 = pneg %p100
        %p253 = pneg %p129
        %p254 = pneg %p126
        %s255 = smul.u32 2, %s26
        %s256 = smul.u32 32, %s26
        %p257 = scmp.eq.s32.totalorder %s26, 0
        // Predicated region
        $region45: #{tpu_custom_call.1} parent=31 // pred_check
          %p258 = pneg %p257
        $region46: #{tpu_custom_call.1} parent=31 // pred_check_branch
          %260 = sbr.rel (%p258) target = $region48
        $region47: #{tpu_custom_call.1} parent=31 // pred_region
          %261 = vst [vmem:[#allocation2] sm:$0x3] 0.0
        $region48: #{tpu_custom_call.1} parent=31 // pred_fallthru
          _
        %v262 = vld [vmem:[#allocation2] sm:$0x3]
        %v263 = vld [vmem:[%s216] sm:$0x3]
        %v264 = vld [vmem:[%s226] sm:$0xf]
        %v265 = vld [vmem:[%s226 + $0x4] sm:$0xf]
        %v266 = vld [vmem:[%s226 + $0x8] sm:$0xf]
        %v267 = vld [vmem:[%s226 + $0xc] sm:$0xf]
        %v268 = vld [vmem:[%s226 + $0x10] sm:$0xf]
        %v269 = vld [vmem:[%s226 + $0x14] sm:$0xf]
        %v270 = vld [vmem:[%s226 + $0x18] sm:$0xf]
        %v271 = vld [vmem:[%s226 + $0x1c] sm:$0xf]
        %v272 = vld [vmem:[%s226 + $0x20] sm:$0xf]
        %v273 = vld [vmem:[%s226 + $0x24] sm:$0xf]
        %v274 = vld [vmem:[%s226 + $0x28] sm:$0xf]
        %v275 = vld [vmem:[%s226 + $0x2c] sm:$0xf]
        %v276 = vld [vmem:[%s226 + $0x30] sm:$0xf]
        %v277 = vld [vmem:[%s226 + $0x34] sm:$0xf]
        %v278 = vld [vmem:[%s226 + $0x38] sm:$0xf]
        %v279 = vld [vmem:[%s226 + $0x3c] sm:$0xf]
        %v280 = vld [vmem:[%s226 + $0x40] sm:$0xf]
        %v281 = vld [vmem:[%s226 + $0x44] sm:$0xf]
        %v282 = vld [vmem:[%s226 + $0x48] sm:$0xf]
        %v283 = vld [vmem:[%s226 + $0x4c] sm:$0xf]
        %v284 = vld [vmem:[%s226 + $0x50] sm:$0xf]
        %v285 = vld [vmem:[%s226 + $0x54] sm:$0xf]
        %v286 = vld [vmem:[%s226 + $0x58] sm:$0xf]
        %v287 = vld [vmem:[%s226 + $0x5c] sm:$0xf]
        %v288 = vld [vmem:[%s226 + $0x60] sm:$0xf]
        %v289 = vld [vmem:[%s226 + $0x64] sm:$0xf]
        %v290 = vld [vmem:[%s226 + $0x68] sm:$0xf]
        %v291 = vld [vmem:[%s226 + $0x6c] sm:$0xf]
        %v292 = vld [vmem:[%s226 + $0x70] sm:$0xf]
        %v293 = vld [vmem:[%s226 + $0x74] sm:$0xf]
        %v294 = vld [vmem:[%s226 + $0x78] sm:$0xf]
        %v295 = vld [vmem:[%s226 + $0x7c] sm:$0xf]
        %297 = vst [vmem:[#allocation1] ss:$9 sm:$0xff] %v263
        %v298 = vld [vmem:[#allocation1] sm:$0xff]
        %v299 = vld [vmem:[#allocation1 + $0x9] sm:$0xff]
        %v334 = vunpack.c.l.b16 %v264
        %v335 = vunpack.c.l.b16 %v265
        %v336 = vunpack.c.l.b16 %v266
        %v337 = vunpack.c.l.b16 %v267
        %v338 = vunpack.c.l.b16 %v268
        %v339 = vunpack.c.l.b16 %v269
        %v340 = vunpack.c.l.b16 %v270
        %v341 = vunpack.c.l.b16 %v271
        %v342 = vunpack.c.l.b16 %v272
        %v343 = vunpack.c.l.b16 %v273
        %v344 = vunpack.c.l.b16 %v274
        %v345 = vunpack.c.l.b16 %v275
        %v346 = vunpack.c.l.b16 %v276
        %v347 = vunpack.c.l.b16 %v277
        %v348 = vunpack.c.l.b16 %v278
        %v349 = vunpack.c.l.b16 %v279
        %v350 = vunpack.c.l.b16 %v280
        %v351 = vunpack.c.l.b16 %v281
        %v352 = vunpack.c.l.b16 %v282
        %v353 = vunpack.c.l.b16 %v283
        %v354 = vunpack.c.l.b16 %v284
        %v355 = vunpack.c.l.b16 %v285
        %v356 = vunpack.c.l.b16 %v286
        %v357 = vunpack.c.l.b16 %v287
        %v358 = vunpack.c.l.b16 %v288
        %v359 = vunpack.c.l.b16 %v289
        %v360 = vunpack.c.l.b16 %v290
        %v361 = vunpack.c.l.b16 %v291
        %v362 = vunpack.c.l.b16 %v292
        %v363 = vunpack.c.l.b16 %v293
        %v364 = vunpack.c.l.b16 %v294
        %v365 = vunpack.c.l.b16 %v295
        %v366 = vpack.c.b16 %v335, %v334
        %v367 = vpack.c.b16 %v337, %v336
        %v368 = vpack.c.b16 %v339, %v338
        %v369 = vpack.c.b16 %v341, %v340
        %v370 = vpack.c.b16 %v343, %v342
        %v371 = vpack.c.b16 %v345, %v344
        %v372 = vpack.c.b16 %v347, %v346
        %v373 = vpack.c.b16 %v349, %v348
        %v374 = vpack.c.b16 %v351, %v350
        %v375 = vpack.c.b16 %v353, %v352
        %v376 = vpack.c.b16 %v355, %v354
        %v377 = vpack.c.b16 %v357, %v356
        %v378 = vpack.c.b16 %v359, %v358
        %v379 = vpack.c.b16 %v361, %v360
        %v380 = vpack.c.b16 %v363, %v362
        %v381 = vpack.c.b16 %v365, %v364
        %398 = vmatpush.bf16.msra.mxu0 %v373
        %399 = vmatpush.bf16.msra.mxu0 %v372
        %400 = vmatpush.bf16.msra.mxu0 %v371
        %401 = vmatpush.bf16.msra.mxu0 %v370
        %402 = vmatpush.bf16.msra.mxu0 %v369
        %403 = vmatpush.bf16.msra.mxu0 %v368
        %404 = vmatpush.bf16.msra.mxu0 %v367
        %405 = vmatpush.bf16.msra.mxu0 %v366
        %406 = vmatmul.bf16.gmra.mxu0 %v298
        %v407 = vpop.f32.mrf.mxu0
        %v408 = vadd.f32 0.0, %v407
        %v409 = vpop.f32.mrf.mxu0
        %410 = vdwg.mxu0
        %411 = vmatpush.bf16.msra.mxu0 %v381
        %412 = vmatpush.bf16.msra.mxu0 %v380
        %413 = vmatpush.bf16.msra.mxu0 %v379
        %414 = vmatpush.bf16.msra.mxu0 %v378
        %415 = vmatpush.bf16.msra.mxu0 %v377
        %416 = vmatpush.bf16.msra.mxu0 %v376
        %417 = vmatpush.bf16.msra.mxu0 %v375
        %418 = vmatpush.bf16.msra.mxu0 %v374
        %419 = vmatmul.bf16.gmra.mxu0 %v299
        %v420 = vpop.f32.mrf.mxu0
        %v421 = vadd.f32 %v408, %v420
        %v422 = vpop.f32.mrf.mxu0
        %423 = vdwg.mxu0
        %v424 = vadd.f32 %v262, %v421
        %425 = vst [vmem:[#allocation2] sm:$0x3] %v424
        %p426 = scmp.eq.s32.totalorder %s26, 2
        // Predicated region
        $region49: #{tpu_custom_call.1} parent=31 // pred_check
          %p427 = pneg %p426
        $region50: #{tpu_custom_call.1} parent=31 // pred_check_branch
          %429 = sbr.rel (%p427) target = $region52
        $region51: #{tpu_custom_call.1} parent=31 // pred_region
          %v430 = vld [vmem:[#allocation2] sm:$0x3]
          %v431 = vmul.f32 %v430, %v430
          %vm432 = vcmask 1041408
          %v433 = vsel %vm432, %v431, 0.0
          %434 = vadd.xlane.f32.xlu0 %v433
          %v435 = vpop.xlane.xlu0 %434
          %v436 = vmax.f32 %v435, 1e-12
          %v437 = vrsqrt.pop %v436
          %v438 = vmul.f32 %v437, %v436
          %v439 = vmul.f32 %v438, %v437
          %v440 = vmul.f32 0.5, %v439
          %v441 = vsub.f32 1.5, %v440
          %v442 = vmul.f32 %v437, %v441
          %vm443 = vweird.f32 %v436
          %vm444 = vweird.f32 %v437
          %vm445 = vmor %vm443, %vm444
          %v446 = vsel %vm445, %v437, %v442
          %v447 = vmul.f32 %v446, 100.0
          %v448 = vmul.f32 %v430, %v447
          %v449 = vld [vmem:[#allocation8] sm:$0xf]
          %v450 = vld [vmem:[#allocation8 + $0x4] sm:$0xf]
          %v451 = vld [vmem:[#allocation8 + $0x8] sm:$0xf]
          %v452 = vld [vmem:[#allocation8 + $0xc] sm:$0xf]
          %v453 = vld [vmem:[#allocation8 + $0x10] sm:$0xf]
          %v454 = vld [vmem:[#allocation8 + $0x14] sm:$0xf]
          %v455 = vld [vmem:[#allocation8 + $0x18] sm:$0xf]
          %v456 = vld [vmem:[#allocation8 + $0x1c] sm:$0xf]
          %v457 = vld [vmem:[#allocation8 + $0x20] sm:$0xf]
          %v458 = vld [vmem:[#allocation8 + $0x24] sm:$0xf]
          %v459 = vld [vmem:[#allocation8 + $0x28] sm:$0xf]
          %v460 = vld [vmem:[#allocation8 + $0x2c] sm:$0xf]
          %v461 = vld [vmem:[#allocation8 + $0x30] sm:$0xf]
          %v462 = vld [vmem:[#allocation8 + $0x34] sm:$0xf]
          %v463 = vld [vmem:[#allocation8 + $0x38] sm:$0xf]
          %v464 = vld [vmem:[#allocation8 + $0x3c] sm:$0xf]
          %v465 = vunpack.c.l.bf16 %v449
          %v466 = vunpack.c.l.bf16 %v450
          %v467 = vunpack.c.l.bf16 %v451
          %v468 = vunpack.c.l.bf16 %v452
          %v469 = vunpack.c.l.bf16 %v453
          %v470 = vunpack.c.l.bf16 %v454
          %v471 = vunpack.c.l.bf16 %v455
          %v472 = vunpack.c.l.bf16 %v456
          %v473 = vunpack.c.l.bf16 %v457
          %v474 = vunpack.c.l.bf16 %v458
          %v475 = vunpack.c.l.bf16 %v459
          %v476 = vunpack.c.l.bf16 %v460
          %v477 = vunpack.c.l.bf16 %v461
          %v478 = vunpack.c.l.bf16 %v462
          %v479 = vunpack.c.l.bf16 %v463
          %v480 = vunpack.c.l.bf16 %v464
          %481 = vmatpush.msra.mxu0 %v480
          %482 = vmatpush.msra.mxu0 %v479
          %483 = vmatpush.msra.mxu0 %v478
          %484 = vmatpush.msra.mxu0 %v477
          %485 = vmatpush.msra.mxu0 %v476
          %486 = vmatpush.msra.mxu0 %v475
          %487 = vmatpush.msra.mxu0 %v474
          %488 = vmatpush.msra.mxu0 %v473
          %489 = vmatpush.msra.mxu0 %v472
          %490 = vmatpush.msra.mxu0 %v471
          %491 = vmatpush.msra.mxu0 %v470
          %492 = vmatpush.msra.mxu0 %v469
          %493 = vmatpush.msra.mxu0 %v468
          %494 = vmatpush.msra.mxu0 %v467
          %495 = vmatpush.msra.mxu0 %v466
          %496 = vmatpush.msra.mxu0 %v465
          %497 = vmatmul.f32.gmra.mxu0 %v448
          %v498 = vpop.f32.mrf.mxu0
          %v499 = vadd.f32 0.0, %v498
          %500 = vdwg.mxu0
          %501 = vst [vmem:[#allocation9] sm:$0x3] %v499
        $region52: #{tpu_custom_call.1} parent=31 // pred_fallthru
          _
        // Predicated region
        $region53: #{tpu_custom_call.1} parent=31 // pred_check
          %p502 = pneg %p126
        $region54: #{tpu_custom_call.1} parent=31 // pred_check_branch
          %504 = sbr.rel (%p502) target = $region56
        $region55: #{tpu_custom_call.1} parent=31 // pred_region
          %506 = vsyncadd [#allocation5], 0
          %s507 = smul.addr %s25, 2
          %s508 = scalar_lea.hbm %s3, %s507
          %s510 = sshll.u32 [#allocation9], 4
          %s511 = int_to_ptr.vmem [resolvable:$true] %s510
          %s512 = sshll.u32 %s508, 4
          %s513 = int_to_ptr.hbm [resolvable:$true] %s512
          %515 = dma.vmem_to_hbm [thread:$0]  %s511, 32, %s513, [#allocation5]
        $region56: #{tpu_custom_call.1} parent=31 // pred_fallthru
          _
        // Predicated region
        $region57: #{tpu_custom_call.1} parent=31 // pred_check
          %p516 = pneg %p126
        $region58: #{tpu_custom_call.1} parent=31 // pred_check_branch
          %518 = sbr.rel (%p516) target = $region60
        $region59: #{tpu_custom_call.1} parent=31 // pred_region
          %520 = dma.done [#allocation5], 32
        $region60: #{tpu_custom_call.1} parent=31 // pred_fallthru
          _
      $region32: #{tpu_custom_call.1} parent=5 // pred_fallthru
        _
      %p521 = scmp.le.s32.totalorder 2, %s16
      // Predicated region
      $region61: #{tpu_custom_call.1} parent=5 // pred_check
        %p522 = pneg %p521
      $region62: #{tpu_custom_call.1} parent=5 // pred_check_branch
        %524 = sbr.rel (%p522) target = $region64
      $region63: #{tpu_custom_call.1} parent=5 // pred_region
        %s525 = ssub.s32 %s16, 2
      $region64: #{tpu_custom_call.1} parent=5 // pred_fallthru
        _
    $region6: #{tpu_custom_call.1} parent=1 // loop_footer
      %s20 = sadd.s32 1, %s16
    $region7: #{tpu_custom_call.1} parent=1 // loop_footer_branch
      %15 = sbr.rel target = $region3
    $region8: #{tpu_custom_call.1} parent=1 // loop_exit
      _
    %526 = vsyncpa [#allocation4], 1
    %s527 = scalar_lea.sflag [#allocation4], 1
    %528 = vsyncpa %s527, 1
    %529 = vsyncpa [#allocation7], 1
    %s530 = scalar_lea.sflag [#allocation7], 1
    %531 = vsyncpa %s530, 1
    %532 = vsyncpa [#allocation5], 1
    %s533 = scalar_lea.sflag [#allocation5], 1
    %534 = vsyncpa %s533, 1

</llo_original>
